<compile_context>
chip_gen: v5e
topology: v5e:2x2
jax: 0.10.0
libtpu: 0.0.40
codegen_flags: <defaults>
</compile_context>

<pallas_src>
import functools

import jax
import jax.numpy as jnp
from jax.experimental import pallas as pl
from jax.experimental.pallas import tpu as pltpu

# ---------------- problem sizes (small, consistent with the module) ----------
EPISODE_NUM = 2
EP_LEN = 8
N_AGENTS = 4
STATE_DIM = 32
QMIX_HIDDEN = 32


def _qmix_kernel(qs_ref, wcat_ref, bcat_ref, hb2w2_ref, hb2b2_ref, out_ref,
                 *, n_agents, hidden_dim, state_dim):
    H = hidden_dim
    NH = n_agents * H

    qs = qs_ref[...].astype(jnp.float32)          # (NH + S, TB)
    q_rep = qs[0:NH, :]                            # (NH, TB), row a*H+h == q[:, a]
    s = qs[NH:NH + state_dim, :]                   # (S,  TB)

    # All four state-consuming hyper layers in one MXU push:
    # (NH + 3H, S) @ (S, TB) -> (NH + 3H, TB)
    h_all = (jnp.dot(wcat_ref[...], s, preferred_element_type=jnp.float32)
             + bcat_ref[...])

    w1 = jnp.abs(h_all[0:NH, :])                              # (NH, TB)
    b1 = h_all[NH:NH + H, :]                                  # (H,  TB)
    w2 = jnp.abs(h_all[NH + H:NH + 2 * H, :])                 # (H,  TB)
    hb2_h = jnp.maximum(h_all[NH + 2 * H:NH + 3 * H, :], 0.0)  # (H, TB)

    # hidden_pre[h, b] = sum_a q[b, a] * w1[b, a, h]   (torch.bmm(q, w1))
    mult = w1 * q_rep                              # one vreg-wide multiply
    acc = mult[0:H, :]
    for a in range(1, n_agents):                   # tile-aligned sublane slices
        acc = acc + mult[a * H:(a + 1) * H, :]
    hidden_pre = acc + b1

    # ELU (alpha = 1, PyTorch default)
    hidden = jnp.where(hidden_pre > 0, hidden_pre,
                       jnp.exp(jnp.minimum(hidden_pre, 0.0)) - 1.0)

    # q_total = sum_h hidden*w2 + (sum_h relu_h * hb2w2 + hb2b2)
    #   -> fold the (H,1) second hyper_b2 layer into the same reduction.
    final = hidden * w2 + hb2_h * hb2w2_ref[...]               # (H, TB)
    q_row = jnp.sum(final, axis=0, keepdims=True) + hb2b2_ref[...]  # (1, TB)
    out_ref[...] = q_row.astype(out_ref.dtype)                 # lane-dense store


def _pick_batch_tile(B):
    """Whole batch in one tile when it fits comfortably; else 128-multiples."""
    if B <= 1024:
        return B
    for tb in (1024, 512, 256, 128):
        if B % tb == 0:
            return tb
    return B


def qmix_forward(q_values, states, params):
    """q_values: (E, T, N), states: (E, T, S) -> q_total: (E, T, 1)"""
    E, T, N = q_values.shape
    S = states.shape[-1]
    H = QMIX_HIDDEN
    B = E * T
    NH = N * H

    (w1w, w1b, b1w, b1b, w2w, w2b, hb2w1, hb2b1, hb2w2, hb2b2) = params

    # ---- wrapper-side layout plumbing (free XLA ops, outside the kernel) ----
    q_flat = q_values.reshape(B, N)
    s_flat = states.reshape(B, S)
    # Repeat q per agent so the per-sample bmm becomes one elementwise multiply.
    q_rep = jnp.repeat(q_flat, H, axis=1)                        # (B, N*H)
    qs_t = jnp.concatenate([q_rep, s_flat], axis=1).T            # (NH+S, B)

    # Fuse the 4 state-consuming hyper-nets into one weight slab / bias column.
    wcat_t = jnp.concatenate([w1w, b1w, w2w, hb2w1], axis=1).T   # (NH+3H, S)
    bcat_t = jnp.concatenate([w1b, b1b, w2b, hb2b1], axis=1).T   # (NH+3H, 1)

    TB = _pick_batch_tile(B)
    assert B % TB == 0
    grid = (B // TB,)

    kernel = functools.partial(_qmix_kernel, n_agents=N, hidden_dim=H,
                               state_dim=S)
    rep = lambda shape: pl.BlockSpec(shape, lambda i: (0, 0))    # grid-invariant

    out_row = pl.pallas_call(
        kernel,
        out_shape=jax.ShapeDtypeStruct((1, B), jnp.float32),
        grid_spec=pltpu.PrefetchScalarGridSpec(
            num_scalar_prefetch=0,
            grid=grid,
            in_specs=[
                pl.BlockSpec((NH + S, TB), lambda i: (0, i)),    # q_rep ++ states (T)
                rep((NH + 3 * H, S)),                            # fused hyper weights
                rep((NH + 3 * H, 1)),                            # fused hyper biases
                rep((H, 1)),                                     # hyper_b2[2] weight
                rep((1, 1)),                                     # hyper_b2[2] bias
            ],
            out_specs=pl.BlockSpec((1, TB), lambda i: (0, i)),   # batch on lanes
        ),
        compiler_params=pltpu.CompilerParams(
            dimension_semantics=("parallel",)),
    )(qs_t, wcat_t, bcat_t, hb2w2, hb2b2)

    return out_row[0].reshape(E, T, 1)


def init_params(key, state_dim, n_agents, hidden_dim):
    """Deterministic nn.Linear-style init; weights stored as (in, out)."""
    def linear(key, fan_in, fan_out):
        kw, kb = jax.random.split(key)
        bound = 1.0 / jnp.sqrt(fan_in)
        w = jax.random.uniform(kw, (fan_in, fan_out), jnp.float32, -bound, bound)
        b = jax.random.uniform(kb, (1, fan_out), jnp.float32, -bound, bound)
        return w, b

    keys = jax.random.split(key, 5)
    w1w, w1b = linear(keys[0], state_dim, n_agents * hidden_dim)   # hyper_w1
    b1w, b1b = linear(keys[1], state_dim, hidden_dim)              # hyper_b1
    w2w, w2b = linear(keys[2], state_dim, hidden_dim)              # hyper_w2
    hb2w1, hb2b1 = linear(keys[3], state_dim, hidden_dim)          # hyper_b2[0]
    hb2w2, hb2b2 = linear(keys[4], hidden_dim, 1)                  # hyper_b2[2]
    return (w1w, w1b, b1w, b1b, w2w, w2b, hb2w1, hb2b1, hb2w2, hb2b2)


def qmix_reference(q_values, states, params):
    """Pure-JAX reference mirroring the PyTorch forward exactly."""
    E, T, N = q_values.shape
    S = states.shape[-1]
    H = QMIX_HIDDEN
    (w1w, w1b, b1w, b1b, w2w, w2b, hb2w1, hb2b1, hb2w2, hb2b2) = params
    q = q_values.reshape(-1, 1, N)
    s = states.reshape(-1, S)
    w1 = jnp.abs(s @ w1w + w1b).reshape(-1, N, H)
    b1 = (s @ b1w + b1b).reshape(-1, 1, H)
    hidden = jax.nn.elu(jnp.einsum('bij,bjk->bik', q, w1) + b1)
    w2 = jnp.abs(s @ w2w + w2b).reshape(-1, H, 1)
    b2 = (jnp.maximum(s @ hb2w1 + hb2b1, 0.0) @ hb2w2 + hb2b2).reshape(-1, 1, 1)
    q_total = jnp.einsum('bij,bjk->bik', hidden, w2) + b2
    return q_total.reshape(E, -1, 1)


if __name__ == "__main__":
    key = jax.random.PRNGKey(0)
    k_q, k_s, k_p = jax.random.split(key, 3)

    q_values = jax.random.normal(k_q, (EPISODE_NUM, EP_LEN, N_AGENTS), jnp.float32)
    states = jax.random.normal(k_s, (EPISODE_NUM, EP_LEN, STATE_DIM), jnp.float32)
    params = init_params(k_p, STATE_DIM, N_AGENTS, QMIX_HIDDEN)

    out = qmix_forward(q_values, states, params)
    out = jax.block_until_ready(out)

    ref = qmix_reference(q_values, states, params)
    assert out.shape == (EPISODE_NUM, EP_LEN, 1)
    assert jnp.allclose(out, ref, atol=1e-4, rtol=1e-4), "mismatch vs reference"

    print("KERNEL_OK")
</pallas_src>

<mosaic_0001>
module attributes {stable_mosaic.version = 11 : i64} {
  func.func @_qmix_kernel(%arg0: i32, %arg1: memref<160x16xf32, #tpu.memory_space<vmem>>, %arg2: memref<224x32xf32, #tpu.memory_space<vmem>>, %arg3: memref<224x1xf32, #tpu.memory_space<vmem>>, %arg4: memref<32x1xf32, #tpu.memory_space<vmem>>, %arg5: memref<1x1xf32, #tpu.memory_space<vmem>>, %arg6: memref<1x16xf32, #tpu.memory_space<vmem>>) attributes {dimension_semantics = [#tpu.dimension_semantics<parallel>], iteration_bounds = array<i64: 1>, scalar_prefetch = 0 : i64, scratch_operands = 0 : i64, tpu.core_type = #tpu.core_type<tc>, window_params = [{transform_indices = @transform_0, window_bounds = array<i64: 160, 16>}, {pipeline_mode = #tpu.pipeline_mode<synchronous>, transform_indices = @transform_1, window_bounds = array<i64: 224, 32>}, {pipeline_mode = #tpu.pipeline_mode<synchronous>, transform_indices = @transform_2, window_bounds = array<i64: 224, 1>}, {pipeline_mode = #tpu.pipeline_mode<synchronous>, transform_indices = @transform_3, window_bounds = array<i64: 32, 1>}, {pipeline_mode = #tpu.pipeline_mode<synchronous>, transform_indices = @transform_4, window_bounds = array<i64: 1, 1>}, {transform_indices = @transform_5, window_bounds = array<i64: 1, 16>}]} {
    %c0 = arith.constant 0 : index
    %c0_0 = arith.constant 0 : index
    %0 = vector.load %arg1[%c0, %c0_0] : memref<160x16xf32, #tpu.memory_space<vmem>>, vector<160x16xf32>
    %1 = vector.extract_strided_slice %0 {offsets = [0, 0], sizes = [128, 16], strides = [1, 1]} : vector<160x16xf32> to vector<128x16xf32>
    %2 = vector.extract_strided_slice %0 {offsets = [128, 0], sizes = [32, 16], strides = [1, 1]} : vector<160x16xf32> to vector<32x16xf32>
    %c0_1 = arith.constant 0 : index
    %c0_2 = arith.constant 0 : index
    %3 = vector.load %arg2[%c0_1, %c0_2] : memref<224x32xf32, #tpu.memory_space<vmem>>, vector<224x32xf32>
    %cst = arith.constant dense<0.000000e+00> : vector<224x16xf32>
    %4 = tpu.matmul %3, %2, %cst {dimension_numbers = #tpu.dot_dimension_numbers<[1], [0], [0], [1], [0, 0, 1, 1], [], []>} : vector<224x32xf32>, vector<32x16xf32>, vector<224x16xf32> -> vector<224x16xf32>
    %c0_3 = arith.constant 0 : index
    %c0_4 = arith.constant 0 : index
    %5 = vector.load %arg3[%c0_3, %c0_4] : memref<224x1xf32, #tpu.memory_space<vmem>>, vector<224x1xf32>
    %6 = vector.broadcast %5 : vector<224x1xf32> to vector<224x16xf32>
    %7 = arith.addf %4, %6 : vector<224x16xf32>
    %8 = vector.extract_strided_slice %7 {offsets = [0, 0], sizes = [128, 16], strides = [1, 1]} : vector<224x16xf32> to vector<128x16xf32>
    %9 = math.absf %8 : vector<128x16xf32>
    %10 = vector.extract_strided_slice %7 {offsets = [128, 0], sizes = [32, 16], strides = [1, 1]} : vector<224x16xf32> to vector<32x16xf32>
    %11 = vector.extract_strided_slice %7 {offsets = [160, 0], sizes = [32, 16], strides = [1, 1]} : vector<224x16xf32> to vector<32x16xf32>
    %12 = math.absf %11 : vector<32x16xf32>
    %13 = vector.extract_strided_slice %7 {offsets = [192, 0], sizes = [32, 16], strides = [1, 1]} : vector<224x16xf32> to vector<32x16xf32>
    %cst_5 = arith.constant 0.000000e+00 : f32
    %14 = vector.broadcast %cst_5 : f32 to vector<32x16xf32>
    %15 = arith.maximumf %13, %14 : vector<32x16xf32>
    %16 = arith.mulf %9, %1 : vector<128x16xf32>
    %17 = vector.extract_strided_slice %16 {offsets = [0, 0], sizes = [32, 16], strides = [1, 1]} : vector<128x16xf32> to vector<32x16xf32>
    %18 = vector.extract_strided_slice %16 {offsets = [32, 0], sizes = [32, 16], strides = [1, 1]} : vector<128x16xf32> to vector<32x16xf32>
    %19 = arith.addf %17, %18 : vector<32x16xf32>
    %20 = vector.extract_strided_slice %16 {offsets = [64, 0], sizes = [32, 16], strides = [1, 1]} : vector<128x16xf32> to vector<32x16xf32>
    %21 = arith.addf %19, %20 : vector<32x16xf32>
    %22 = vector.extract_strided_slice %16 {offsets = [96, 0], sizes = [32, 16], strides = [1, 1]} : vector<128x16xf32> to vector<32x16xf32>
    %23 = arith.addf %21, %22 : vector<32x16xf32>
    %24 = arith.addf %23, %10 : vector<32x16xf32>
    %cst_6 = arith.constant 0.000000e+00 : f32
    %25 = vector.broadcast %cst_6 : f32 to vector<32x16xf32>
    %26 = arith.cmpf ogt, %24, %25 : vector<32x16xf32>
    %cst_7 = arith.constant 0.000000e+00 : f32
    %27 = vector.broadcast %cst_7 : f32 to vector<32x16xf32>
    %28 = arith.minimumf %24, %27 : vector<32x16xf32>
    %29 = math.exp %28 : vector<32x16xf32>
    %cst_8 = arith.constant 1.000000e+00 : f32
    %30 = vector.broadcast %cst_8 : f32 to vector<32x16xf32>
    %31 = arith.subf %29, %30 : vector<32x16xf32>
    %32 = arith.select %26, %24, %31 : vector<32x16xi1>, vector<32x16xf32>
    %33 = arith.mulf %32, %12 : vector<32x16xf32>
    %c0_9 = arith.constant 0 : index
    %c0_10 = arith.constant 0 : index
    %34 = vector.load %arg4[%c0_9, %c0_10] : memref<32x1xf32, #tpu.memory_space<vmem>>, vector<32x1xf32>
    %35 = vector.broadcast %34 : vector<32x1xf32> to vector<32x16xf32>
    %36 = arith.mulf %15, %35 : vector<32x16xf32>
    %37 = arith.addf %33, %36 : vector<32x16xf32>
    %cst_11 = arith.constant dense<0.000000e+00> : vector<16xf32>
    %38 = vector.multi_reduction <add>, %37, %cst_11 [0] : vector<32x16xf32> to vector<16xf32>
    %39 = vector.shape_cast %38 : vector<16xf32> to vector<1x16xf32>
    %c0_12 = arith.constant 0 : index
    %c0_13 = arith.constant 0 : index
    %40 = vector.load %arg5[%c0_12, %c0_13] : memref<1x1xf32, #tpu.memory_space<vmem>>, vector<1x1xf32>
    %41 = vector.broadcast %40 : vector<1x1xf32> to vector<1x16xf32>
    %42 = arith.addf %39, %41 : vector<1x16xf32>
    %c0_14 = arith.constant 0 : index
    %c0_15 = arith.constant 0 : index
    %43 = vector.load %arg6[%c0_14, %c0_15] : memref<1x16xf32, #tpu.memory_space<vmem>>, vector<1x16xf32>
    tpu.vector_store %arg6[%c0_14, %c0_15], %42 {strides = array<i32>} : memref<1x16xf32, #tpu.memory_space<vmem>>, vector<1x16xf32>,
    return
  }
  func.func @transform_0(%arg0: i32) -> (i32, i32) {
    %c0_i32 = arith.constant 0 : i32
    %c0_i32_0 = arith.constant 0 : i32
    return %c0_i32, %arg0 : i32, i32
  }
  func.func @transform_1(%arg0: i32) -> (i32, i32) {
    %c0_i32 = arith.constant 0 : i32
    %c0_i32_0 = arith.constant 0 : i32
    %c0_i32_1 = arith.constant 0 : i32
    return %c0_i32, %c0_i32_0 : i32, i32
  }
  func.func @transform_2(%arg0: i32) -> (i32, i32) {
    %c0_i32 = arith.constant 0 : i32
    %c0_i32_0 = arith.constant 0 : i32
    %c0_i32_1 = arith.constant 0 : i32
    return %c0_i32, %c0_i32_0 : i32, i32
  }
  func.func @transform_3(%arg0: i32) -> (i32, i32) {
    %c0_i32 = arith.constant 0 : i32
    %c0_i32_0 = arith.constant 0 : i32
    %c0_i32_1 = arith.constant 0 : i32
    return %c0_i32, %c0_i32_0 : i32, i32
  }
  func.func @transform_4(%arg0: i32) -> (i32, i32) {
    %c0_i32 = arith.constant 0 : i32
    %c0_i32_0 = arith.constant 0 : i32
    %c0_i32_1 = arith.constant 0 : i32
    return %c0_i32, %c0_i32_0 : i32, i32
  }
  func.func @transform_5(%arg0: i32) -> (i32, i32) {
    %c0_i32 = arith.constant 0 : i32
    %c0_i32_0 = arith.constant 0 : i32
    return %c0_i32, %arg0 : i32, i32
  }
}

</mosaic_0001>

<llo_original>
// kernel: tpu_custom_call.1
$region0: #{tpu_custom_call.1}
  #allocation0 [shape = 'u32[]', space=smem, size = 0x4, offset = 0x4, fixed_abs, tag = 'smem constant byte address 0x4 - core index']
  #allocation1 [shape = 'u32[72,128]{1,0:T(1,128)}', space=vmem, size = 0x9000, scoped, tag = 'internal scratch']
  #allocation2 [shape = 'f32[1,1]{1,0:T(1,128)S(1)}', space=vmem, size = 0x200, scoped, tag = 'scoped memory for tpu_custom_call.1']
  %s0 = inlined_call_operand.vmem [shape: f32[160,16], index: 0, kind: input, shape index: {}]
  %s1 = inlined_call_operand.vmem [shape: f32[224,32], index: 1, kind: input, shape index: {}]
  %s2 = inlined_call_operand.vmem [shape: f32[224,1], index: 2, kind: input, shape index: {}]
  %s3 = inlined_call_operand.vmem [shape: f32[32,1], index: 3, kind: input, shape index: {}]
  %s4 = inlined_call_operand.<no memory space> [shape: f32[1,1], index: 4, kind: input, shape index: {}]
  %s5 = inlined_call_operand.hbm [shape: f32[1,16], index: 5, kind: output, shape index: {}]
  %s6 = sld [smem:[#allocation0]]
  $region30: #{tpu_custom_call.1} parent=0
    _
  %s8 = ssub.s32 1, %s6
  %s9 = scalar_select 0, %s8, %s6
  %v10 = vstv %s4
  %11 = vst [vmem:[#allocation2] sm:$0x1] %v10
  $region1: #{tpu_custom_call.1} parent=0
    #allocation3 [shape = 'u8[512]{0}', space=vmem, size = 0x400, scoped, tag = 'output window, operand 0, single buffered']
    #allocation4 [shape = 's32[1]{0}', space=sflag, size = 0x4, scoped, tag = 'scoped memory for tpu_custom_call.1']
    %12 = vsyncpa [#allocation4], 0
    // Predicated region
    $region2: #{tpu_custom_call.1} parent=1 // pred_check
      _
    $region3: #{tpu_custom_call.1} parent=1 // pred_check_branch
      %14 = sbr.rel (0) target = $region5
    $region4: #{tpu_custom_call.1} parent=1 // pred_region
      _
    $region5: #{tpu_custom_call.1} parent=1 // pred_fallthru
      _
    // Predicated region
    $region6: #{tpu_custom_call.1} parent=1 // pred_check
      _
    $region7: #{tpu_custom_call.1} parent=1 // pred_check_branch
      %16 = sbr.rel (0) target = $region9
    $region8: #{tpu_custom_call.1} parent=1 // pred_region
      _
    $region9: #{tpu_custom_call.1} parent=1 // pred_fallthru
      _
    // Predicated region
    $region10: #{tpu_custom_call.1} parent=1 // pred_check
      _
    $region11: #{tpu_custom_call.1} parent=1 // pred_check_branch
      %18 = sbr.rel (0) target = $region13
    $region12: #{tpu_custom_call.1} parent=1 // pred_region
      _
    $region13: #{tpu_custom_call.1} parent=1 // pred_fallthru
      _
    // Predicated region
    $region14: #{tpu_custom_call.1} parent=1 // pred_check
      _
    $region15: #{tpu_custom_call.1} parent=1 // pred_check_branch
      %20 = sbr.rel (0) target = $region17
    $region16: #{tpu_custom_call.1} parent=1 // pred_region
      _
    $region17: #{tpu_custom_call.1} parent=1 // pred_fallthru
      _
    // Predicated region
    $region18: #{tpu_custom_call.1} parent=1 // pred_check
      _
    $region19: #{tpu_custom_call.1} parent=1 // pred_check_branch
      %22 = sbr.rel (0) target = $region21
    $region20: #{tpu_custom_call.1} parent=1 // pred_region
      _
    $region21: #{tpu_custom_call.1} parent=1 // pred_fallthru
      _
    %v23 = vld [vmem:[%s0] sm:$0xff]
    %v24 = vld [vmem:[%s0 + $0x8] sm:$0xff]
    %v25 = vld [vmem:[%s0 + $0x10] sm:$0xff]
    %v26 = vld [vmem:[%s0 + $0x18] sm:$0xff]
    %v27 = vld [vmem:[%s0 + $0x20] sm:$0xff]
    %v28 = vld [vmem:[%s0 + $0x28] sm:$0xff]
    %v29 = vld [vmem:[%s0 + $0x30] sm:$0xff]
    %v30 = vld [vmem:[%s0 + $0x38] sm:$0xff]
    %v31 = vld [vmem:[%s0 + $0x40] sm:$0xff]
    %v32 = vld [vmem:[%s0 + $0x48] sm:$0xff]
    %v33 = vld [vmem:[%s0 + $0x50] sm:$0xff]
    %v34 = vld [vmem:[%s0 + $0x58] sm:$0xff]
    %v35 = vld [vmem:[%s0 + $0x60] sm:$0xff]
    %v36 = vld [vmem:[%s0 + $0x68] sm:$0xff]
    %v37 = vld [vmem:[%s0 + $0x70] sm:$0xff]
    %v38 = vld [vmem:[%s0 + $0x78] sm:$0xff]
    %v39 = vld [vmem:[%s0 + $0x80] sm:$0xff]
    %v40 = vld [vmem:[%s0 + $0x88] sm:$0xff]
    %v41 = vld [vmem:[%s0 + $0x90] sm:$0xff]
    %v42 = vld [vmem:[%s0 + $0x98] sm:$0xff]
    %v43 = vld [vmem:[%s1] sm:$0xff]
    %v44 = vld [vmem:[%s1 + $0x8] sm:$0xff]
    %v45 = vld [vmem:[%s1 + $0x10] sm:$0xff]
    %v46 = vld [vmem:[%s1 + $0x18] sm:$0xff]
    %v47 = vld [vmem:[%s1 + $0x20] sm:$0xff]
    %v48 = vld [vmem:[%s1 + $0x28] sm:$0xff]
    %v49 = vld [vmem:[%s1 + $0x30] sm:$0xff]
    %v50 = vld [vmem:[%s1 + $0x38] sm:$0xff]
    %v51 = vld [vmem:[%s1 + $0x40] sm:$0xff]
    %v52 = vld [vmem:[%s1 + $0x48] sm:$0xff]
    %v53 = vld [vmem:[%s1 + $0x50] sm:$0xff]
    %v54 = vld [vmem:[%s1 + $0x58] sm:$0xff]
    %v55 = vld [vmem:[%s1 + $0x60] sm:$0xff]
    %v56 = vld [vmem:[%s1 + $0x68] sm:$0xff]
    %v57 = vld [vmem:[%s1 + $0x70] sm:$0xff]
    %v58 = vld [vmem:[%s1 + $0x78] sm:$0xff]
    %v59 = vld [vmem:[%s1 + $0x80] sm:$0xff]
    %v60 = vld [vmem:[%s1 + $0x88] sm:$0xff]
    %v61 = vld [vmem:[%s1 + $0x90] sm:$0xff]
    %v62 = vld [vmem:[%s1 + $0x98] sm:$0xff]
    %v63 = vld [vmem:[%s1 + $0xa0] sm:$0xff]
    %v64 = vld [vmem:[%s1 + $0xa8] sm:$0xff]
    %v65 = vld [vmem:[%s1 + $0xb0] sm:$0xff]
    %v66 = vld [vmem:[%s1 + $0xb8] sm:$0xff]
    %v67 = vld [vmem:[%s1 + $0xc0] sm:$0xff]
    %v68 = vld [vmem:[%s1 + $0xc8] sm:$0xff]
    %v69 = vld [vmem:[%s1 + $0xd0] sm:$0xff]
    %v70 = vld [vmem:[%s1 + $0xd8] sm:$0xff]
    %v71 = vld [vmem:[%s2] sm:$0xff]
    %v72 = vld [vmem:[%s2 + $0x8] sm:$0xff]
    %v73 = vld [vmem:[%s2 + $0x10] sm:$0xff]
    %v74 = vld [vmem:[%s2 + $0x18] sm:$0xff]
    %v75 = vld [vmem:[%s2 + $0x20] sm:$0xff]
    %v76 = vld [vmem:[%s2 + $0x28] sm:$0xff]
    %v77 = vld [vmem:[%s2 + $0x30] sm:$0xff]
    %v78 = vld [vmem:[%s2 + $0x38] sm:$0xff]
    %v79 = vld [vmem:[%s2 + $0x40] sm:$0xff]
    %v80 = vld [vmem:[%s2 + $0x48] sm:$0xff]
    %v81 = vld [vmem:[%s2 + $0x50] sm:$0xff]
    %v82 = vld [vmem:[%s2 + $0x58] sm:$0xff]
    %v83 = vld [vmem:[%s2 + $0x60] sm:$0xff]
    %v84 = vld [vmem:[%s2 + $0x68] sm:$0xff]
    %v85 = vld [vmem:[%s2 + $0x70] sm:$0xff]
    %v86 = vld [vmem:[%s2 + $0x78] sm:$0xff]
    %v87 = vld [vmem:[%s2 + $0x80] sm:$0xff]
    %v88 = vld [vmem:[%s2 + $0x88] sm:$0xff]
    %v89 = vld [vmem:[%s2 + $0x90] sm:$0xff]
    %v90 = vld [vmem:[%s2 + $0x98] sm:$0xff]
    %v91 = vld [vmem:[%s2 + $0xa0] sm:$0xff]
    %v92 = vld [vmem:[%s2 + $0xa8] sm:$0xff]
    %v93 = vld [vmem:[%s2 + $0xb0] sm:$0xff]
    %v94 = vld [vmem:[%s2 + $0xb8] sm:$0xff]
    %v95 = vld [vmem:[%s2 + $0xc0] sm:$0xff]
    %v96 = vld [vmem:[%s2 + $0xc8] sm:$0xff]
    %v97 = vld [vmem:[%s2 + $0xd0] sm:$0xff]
    %v98 = vld [vmem:[%s2 + $0xd8] sm:$0xff]
    %100 = vset.pattern.permute.xlu0 0
    %101 = vperm.xlu0 %100, %v71
    %v102 = vpop.permute.xlu0 %101
    %105 = vset.pattern.permute.xlu0 0
    %106 = vperm.xlu0 %105, %v72
    %v107 = vpop.permute.xlu0 %106
    %110 = vset.pattern.permute.xlu0 0
    %111 = vperm.xlu0 %110, %v73
    %v112 = vpop.permute.xlu0 %111
    %115 = vset.pattern.permute.xlu0 0
    %116 = vperm.xlu0 %115, %v74
    %v117 = vpop.permute.xlu0 %116
    %120 = vset.pattern.permute.xlu0 0
    %121 = vperm.xlu0 %120, %v75
    %v122 = vpop.permute.xlu0 %121
    %125 = vset.pattern.permute.xlu0 0
    %126 = vperm.xlu0 %125, %v76
    %v127 = vpop.permute.xlu0 %126
    %130 = vset.pattern.permute.xlu0 0
    %131 = vperm.xlu0 %130, %v77
    %v132 = vpop.permute.xlu0 %131
    %135 = vset.pattern.permute.xlu0 0
    %136 = vperm.xlu0 %135, %v78
    %v137 = vpop.permute.xlu0 %136
    %140 = vset.pattern.permute.xlu0 0
    %141 = vperm.xlu0 %140, %v79
    %v142 = vpop.permute.xlu0 %141
    %145 = vset.pattern.permute.xlu0 0
    %146 = vperm.xlu0 %145, %v80
    %v147 = vpop.permute.xlu0 %146
    %150 = vset.pattern.permute.xlu0 0
    %151 = vperm.xlu0 %150, %v81
    %v152 = vpop.permute.xlu0 %151
    %155 = vset.pattern.permute.xlu0 0
    %156 = vperm.xlu0 %155, %v82
    %v157 = vpop.permute.xlu0 %156
    %160 = vset.pattern.permute.xlu0 0
    %161 = vperm.xlu0 %160, %v83
    %v162 = vpop.permute.xlu0 %161
    %165 = vset.pattern.permute.xlu0 0
    %166 = vperm.xlu0 %165, %v84
    %v167 = vpop.permute.xlu0 %166
    %170 = vset.pattern.permute.xlu0 0
    %171 = vperm.xlu0 %170, %v85
    %v172 = vpop.permute.xlu0 %171
    %175 = vset.pattern.permute.xlu0 0
    %176 = vperm.xlu0 %175, %v86
    %v177 = vpop.permute.xlu0 %176
    %180 = vset.pattern.permute.xlu0 0
    %181 = vperm.xlu0 %180, %v87
    %v182 = vpop.permute.xlu0 %181
    %185 = vset.pattern.permute.xlu0 0
    %186 = vperm.xlu0 %185, %v88
    %v187 = vpop.permute.xlu0 %186
    %190 = vset.pattern.permute.xlu0 0
    %191 = vperm.xlu0 %190, %v89
    %v192 = vpop.permute.xlu0 %191
    %195 = vset.pattern.permute.xlu0 0
    %196 = vperm.xlu0 %195, %v90
    %v197 = vpop.permute.xlu0 %196
    %200 = vset.pattern.permute.xlu0 0
    %201 = vperm.xlu0 %200, %v91
    %v202 = vpop.permute.xlu0 %201
    %205 = vset.pattern.permute.xlu0 0
    %206 = vperm.xlu0 %205, %v92
    %v207 = vpop.permute.xlu0 %206
    %210 = vset.pattern.permute.xlu0 0
    %211 = vperm.xlu0 %210, %v93
    %v212 = vpop.permute.xlu0 %211
    %215 = vset.pattern.permute.xlu0 0
    %216 = vperm.xlu0 %215, %v94
    %v217 = vpop.permute.xlu0 %216
    %220 = vset.pattern.permute.xlu0 0
    %221 = vperm.xlu0 %220, %v95
    %v222 = vpop.permute.xlu0 %221
    %225 = vset.pattern.permute.xlu0 0
    %226 = vperm.xlu0 %225, %v96
    %v227 = vpop.permute.xlu0 %226
    %230 = vset.pattern.permute.xlu0 0
    %231 = vperm.xlu0 %230, %v97
    %v232 = vpop.permute.xlu0 %231
    %235 = vset.pattern.permute.xlu0 0
    %236 = vperm.xlu0 %235, %v98
    %v237 = vpop.permute.xlu0 %236
    %vm239 = vcmask 261120
    %v241 = vsel %vm239, %v43, 0
    %v244 = vsel %vm239, %v44, 0
    %v247 = vsel %vm239, %v45, 0
    %v250 = vsel %vm239, %v46, 0
    %v253 = vsel %vm239, %v47, 0
    %v256 = vsel %vm239, %v48, 0
    %v259 = vsel %vm239, %v49, 0
    %v262 = vsel %vm239, %v50, 0
    %v265 = vsel %vm239, %v51, 0
    %v268 = vsel %vm239, %v52, 0
    %v271 = vsel %vm239, %v53, 0
    %v274 = vsel %vm239, %v54, 0
    %v277 = vsel %vm239, %v55, 0
    %v280 = vsel %vm239, %v56, 0
    %v283 = vsel %vm239, %v57, 0
    %v286 = vsel %vm239, %v58, 0
    %v289 = vsel %vm239, %v59, 0
    %v292 = vsel %vm239, %v60, 0
    %v295 = vsel %vm239, %v61, 0
    %v298 = vsel %vm239, %v62, 0
    %v301 = vsel %vm239, %v63, 0
    %v304 = vsel %vm239, %v64, 0
    %v307 = vsel %vm239, %v65, 0
    %v310 = vsel %vm239, %v66, 0
    %v313 = vsel %vm239, %v67, 0
    %v316 = vsel %vm239, %v68, 0
    %v319 = vsel %vm239, %v69, 0
    %v322 = vsel %vm239, %v70, 0
    %324 = vmatpush.msra.mxu0 0.0
    %325 = vmatpush.msra.mxu0 0.0
    %326 = vmatpush.msra.mxu0 0.0
    %327 = vmatpush.msra.mxu0 0.0
    %328 = vmatpush.msra.mxu0 0.0
    %329 = vmatpush.msra.mxu0 0.0
    %330 = vmatpush.msra.mxu0 0.0
    %331 = vmatpush.msra.mxu0 0.0
    %332 = vmatpush.msra.mxu0 0.0
    %333 = vmatpush.msra.mxu0 0.0
    %334 = vmatpush.msra.mxu0 0.0
    %335 = vmatpush.msra.mxu0 0.0
    %336 = vmatpush.msra.mxu0 %v42
    %337 = vmatpush.msra.mxu0 %v41
    %338 = vmatpush.msra.mxu0 %v40
    %339 = vmatpush.msra.mxu0 %v39
    %340 = vmatmul.f32.gmra.mxu0 %v241
    %v341 = vpop.f32.mrf.mxu0
    %v342 = vadd.f32 %v102, %v341
    %343 = vmatmul.f32.gmra.mxu0 %v244
    %v344 = vpop.f32.mrf.mxu0
    %v345 = vadd.f32 %v107, %v344
    %346 = vmatmul.f32.gmra.mxu0 %v247
    %v347 = vpop.f32.mrf.mxu0
    %v348 = vadd.f32 %v112, %v347
    %349 = vmatmul.f32.gmra.mxu0 %v250
    %v350 = vpop.f32.mrf.mxu0
    %v351 = vadd.f32 %v117, %v350
    %352 = vmatmul.f32.gmra.mxu0 %v253
    %v353 = vpop.f32.mrf.mxu0
    %v354 = vadd.f32 %v122, %v353
    %355 = vmatmul.f32.gmra.mxu0 %v256
    %v356 = vpop.f32.mrf.mxu0
    %v357 = vadd.f32 %v127, %v356
    %358 = vmatmul.f32.gmra.mxu0 %v259
    %v359 = vpop.f32.mrf.mxu0
    %v360 = vadd.f32 %v132, %v359
    %361 = vmatmul.f32.gmra.mxu0 %v262
    %v362 = vpop.f32.mrf.mxu0
    %v363 = vadd.f32 %v137, %v362
    %364 = vmatmul.f32.gmra.mxu0 %v265
    %v365 = vpop.f32.mrf.mxu0
    %v366 = vadd.f32 %v142, %v365
    %367 = vmatmul.f32.gmra.mxu0 %v268
    %v368 = vpop.f32.mrf.mxu0
    %v369 = vadd.f32 %v147, %v368
    %370 = vmatmul.f32.gmra.mxu0 %v271
    %v371 = vpop.f32.mrf.mxu0
    %v372 = vadd.f32 %v152, %v371
    %373 = vmatmul.f32.gmra.mxu0 %v274
    %v374 = vpop.f32.mrf.mxu0
    %v375 = vadd.f32 %v157, %v374
    %376 = vmatmul.f32.gmra.mxu0 %v277
    %v377 = vpop.f32.mrf.mxu0
    %v378 = vadd.f32 %v162, %v377
    %379 = vmatmul.f32.gmra.mxu0 %v280
    %v380 = vpop.f32.mrf.mxu0
    %v381 = vadd.f32 %v167, %v380
    %382 = vmatmul.f32.gmra.mxu0 %v283
    %v383 = vpop.f32.mrf.mxu0
    %v384 = vadd.f32 %v172, %v383
    %385 = vmatmul.f32.gmra.mxu0 %v286
    %v386 = vpop.f32.mrf.mxu0
    %v387 = vadd.f32 %v177, %v386
    %388 = vmatmul.f32.gmra.mxu0 %v289
    %v389 = vpop.f32.mrf.mxu0
    %v390 = vadd.f32 %v182, %v389
    %391 = vmatmul.f32.gmra.mxu0 %v292
    %v392 = vpop.f32.mrf.mxu0
    %v393 = vadd.f32 %v187, %v392
    %394 = vmatmul.f32.gmra.mxu0 %v295
    %v395 = vpop.f32.mrf.mxu0
    %v396 = vadd.f32 %v192, %v395
    %397 = vmatmul.f32.gmra.mxu0 %v298
    %v398 = vpop.f32.mrf.mxu0
    %v399 = vadd.f32 %v197, %v398
    %400 = vmatmul.f32.gmra.mxu0 %v301
    %v401 = vpop.f32.mrf.mxu0
    %v402 = vadd.f32 %v202, %v401
    %403 = vmatmul.f32.gmra.mxu0 %v304
    %v404 = vpop.f32.mrf.mxu0
    %v405 = vadd.f32 %v207, %v404
    %406 = vmatmul.f32.gmra.mxu0 %v307
    %v407 = vpop.f32.mrf.mxu0
    %v408 = vadd.f32 %v212, %v407
    %409 = vmatmul.f32.gmra.mxu0 %v310
    %v410 = vpop.f32.mrf.mxu0
    %v411 = vadd.f32 %v217, %v410
    %412 = vmatmul.f32.gmra.mxu0 %v313
    %v413 = vpop.f32.mrf.mxu0
    %v414 = vadd.f32 %v222, %v413
    %415 = vmatmul.f32.gmra.mxu0 %v316
    %v416 = vpop.f32.mrf.mxu0
    %v417 = vadd.f32 %v227, %v416
    %418 = vmatmul.f32.gmra.mxu0 %v319
    %v419 = vpop.f32.mrf.mxu0
    %v420 = vadd.f32 %v232, %v419
    %421 = vmatmul.f32.gmra.mxu0 %v322
    %v422 = vpop.f32.mrf.mxu0
    %v423 = vadd.f32 %v237, %v422
    %424 = vdwg.mxu0
    %v425 = vand.u32 2147483647, %v342
    %v426 = vand.u32 2147483647, %v345
    %v427 = vand.u32 2147483647, %v348
    %v428 = vand.u32 2147483647, %v351
    %v429 = vand.u32 2147483647, %v354
    %v430 = vand.u32 2147483647, %v357
    %v431 = vand.u32 2147483647, %v360
    %v432 = vand.u32 2147483647, %v363
    %v433 = vand.u32 2147483647, %v366
    %v434 = vand.u32 2147483647, %v369
    %v435 = vand.u32 2147483647, %v372
    %v436 = vand.u32 2147483647, %v375
    %v437 = vand.u32 2147483647, %v378
    %v438 = vand.u32 2147483647, %v381
    %v439 = vand.u32 2147483647, %v384
    %v440 = vand.u32 2147483647, %v387
    %v441 = vand.u32 2147483647, %v402
    %v442 = vand.u32 2147483647, %v405
    %v443 = vand.u32 2147483647, %v408
    %v444 = vand.u32 2147483647, %v411
    %v445 = vmax.f32 %v414, 0.0
    %v446 = vmax.f32 %v417, 0.0
    %v447 = vmax.f32 %v420, 0.0
    %v448 = vmax.f32 %v423, 0.0
    %v449 = vmul.f32 %v425, %v23
    %v450 = vmul.f32 %v426, %v24
    %v451 = vmul.f32 %v427, %v25
    %v452 = vmul.f32 %v428, %v26
    %v453 = vmul.f32 %v429, %v27
    %v454 = vmul.f32 %v430, %v28
    %v455 = vmul.f32 %v431, %v29
    %v456 = vmul.f32 %v432, %v30
    %v457 = vmul.f32 %v433, %v31
    %v458 = vmul.f32 %v434, %v32
    %v459 = vmul.f32 %v435, %v33
    %v460 = vmul.f32 %v436, %v34
    %v461 = vmul.f32 %v437, %v35
    %v462 = vmul.f32 %v438, %v36
    %v463 = vmul.f32 %v439, %v37
    %v464 = vmul.f32 %v440, %v38
    %v465 = vadd.f32 %v449, %v453
    %v466 = vadd.f32 %v450, %v454
    %v467 = vadd.f32 %v451, %v455
    %v468 = vadd.f32 %v452, %v456
    %v469 = vadd.f32 %v465, %v457
    %v470 = vadd.f32 %v466, %v458
    %v471 = vadd.f32 %v467, %v459
    %v472 = vadd.f32 %v468, %v460
    %v473 = vadd.f32 %v469, %v461
    %v474 = vadd.f32 %v470, %v462
    %v475 = vadd.f32 %v471, %v463
    %v476 = vadd.f32 %v472, %v464
    %v477 = vadd.f32 %v473, %v390
    %v478 = vadd.f32 %v474, %v393
    %v479 = vadd.f32 %v475, %v396
    %v480 = vadd.f32 %v476, %v399
    %vm481 = vcmp.gt.f32.partialorder %v477, 0.0
    %vm482 = vcmp.gt.f32.partialorder %v478, 0.0
    %vm483 = vcmp.gt.f32.partialorder %v479, 0.0
    %vm484 = vcmp.gt.f32.partialorder %v480, 0.0
    %v485 = vmin.f32 %v477, 0.0
    %v486 = vmin.f32 %v478, 0.0
    %v487 = vmin.f32 %v479, 0.0
    %v488 = vmin.f32 %v480, 0.0
    %v489 = vmul.f32 %v485, 1.442695
    %v490 = vpow.pop %v489
    %v491 = vmul.f32 %v486, 1.442695
    %v492 = vpow.pop %v491
    %v493 = vmul.f32 %v487, 1.442695
    %v494 = vpow.pop %v493
    %v495 = vmul.f32 %v488, 1.442695
    %v496 = vpow.pop %v495
    %v497 = vsub.f32 %v490, 1.0
    %v498 = vsub.f32 %v492, 1.0
    %v499 = vsub.f32 %v494, 1.0
    %v500 = vsub.f32 %v496, 1.0
    %v501 = vsel %vm481, %v477, %v497
    %v502 = vsel %vm482, %v478, %v498
    %v503 = vsel %vm483, %v479, %v499
    %v504 = vsel %vm484, %v480, %v500
    %v505 = vmul.f32 %v501, %v441
    %v506 = vmul.f32 %v502, %v442
    %v507 = vmul.f32 %v503, %v443
    %v508 = vmul.f32 %v504, %v444
    %v509 = vld [vmem:[%s3] sm:$0xff]
    %v510 = vld [vmem:[%s3 + $0x8] sm:$0xff]
    %v511 = vld [vmem:[%s3 + $0x10] sm:$0xff]
    %v512 = vld [vmem:[%s3 + $0x18] sm:$0xff]
    %514 = vset.pattern.permute.xlu0 0
    %515 = vperm.xlu0 %514, %v509
    %v516 = vpop.permute.xlu0 %515
    %519 = vset.pattern.permute.xlu0 0
    %520 = vperm.xlu0 %519, %v510
    %v521 = vpop.permute.xlu0 %520
    %524 = vset.pattern.permute.xlu0 0
    %525 = vperm.xlu0 %524, %v511
    %v526 = vpop.permute.xlu0 %525
    %529 = vset.pattern.permute.xlu0 0
    %530 = vperm.xlu0 %529, %v512
    %v531 = vpop.permute.xlu0 %530
    %v533 = vmul.f32 %v445, %v516
    %v534 = vmul.f32 %v446, %v521
    %v535 = vmul.f32 %v447, %v526
    %v536 = vmul.f32 %v448, %v531
    %v537 = vadd.f32 %v505, %v533
    %v538 = vadd.f32 %v506, %v534
    %v539 = vadd.f32 %v507, %v535
    %v540 = vadd.f32 %v508, %v536
    %vm541 = vcmask 130048
    %v542 = vsel %vm541, %v537, 0.0
    %v543 = vsel %vm541, %v538, 0.0
    %v544 = vadd.f32 %v542, %v543
    %v545 = vsel %vm541, %v539, 0.0
    %v546 = vadd.f32 %v544, %v545
    %v547 = vsel %vm541, %v540, 0.0
    %v548 = vadd.f32 %v546, %v547
    %v549 = vrot.slane %v548, 4
    %v550 = vadd.f32 %v548, %v549
    %v551 = vrot.slane %v550, 2
    %v552 = vadd.f32 %v550, %v551
    %v553 = vrot.slane %v552, 1
    %v554 = vadd.f32 %v552, %v553
    %v555 = vld [vmem:[#allocation2] sm:$0x1]
    %557 = vset.pattern.permute.xlu0 0
    %558 = vperm.xlu0 %557, %v555
    %v559 = vpop.permute.xlu0 %558
    %v561 = vperm.slane %v559, 0
    %v562 = vadd.f32 %v554, %v561
    %vm563 = vcmask 122880
    %564 = vst.msk [vmem:[#allocation3] sm:$0x1] %vm563, %v562
    // Predicated region
    $region22: #{tpu_custom_call.1} parent=1 // pred_check
      _
    $region23: #{tpu_custom_call.1} parent=1 // pred_check_branch
      %566 = sbr.rel (0) target = $region25
    $region24: #{tpu_custom_call.1} parent=1 // pred_region
      %568 = vsyncadd [#allocation4], 0
      %s570 = sshll.u32 [#allocation3], 4
      %s571 = int_to_ptr.vmem [resolvable:$true] %s570
      %s572 = sshll.u32 %s5, 4
      %s573 = int_to_ptr.hbm [resolvable:$true] %s572
      %575 = dma.vmem_to_hbm [thread:$0]  %s571, 16, %s573, [#allocation4]
    $region25: #{tpu_custom_call.1} parent=1 // pred_fallthru
      _
    // Predicated region
    $region26: #{tpu_custom_call.1} parent=1 // pred_check
      _
    $region27: #{tpu_custom_call.1} parent=1 // pred_check_branch
      %577 = sbr.rel (0) target = $region29
    $region28: #{tpu_custom_call.1} parent=1 // pred_region
      %579 = dma.done [#allocation4], 16
    $region29: #{tpu_custom_call.1} parent=1 // pred_fallthru
      _
    %580 = vsyncpa [#allocation4], 1

</llo_original>
